<compile_context>
chip_gen: v7x
topology: tpu7x:2x2x1
jax: 0.10.0
libtpu: 0.0.40
codegen_flags: <defaults>
</compile_context>

<pallas_src>
import jax
import jax.numpy as jnp
from jax.experimental import pallas as pl
from jax.experimental.pallas import tpu as pltpu


# --------------------------------------------------------------------------
# Generation-aware tiling configuration
# --------------------------------------------------------------------------
def _round_up(x, m):
    return ((x + m - 1) // m) * m


def _chip_config():
    """(tensorcores_per_chip, vmem_bytes_per_core); conservative fallback."""
    kind = ""
    try:
        dev = jax.devices()[0]
        if dev.platform == "tpu":
            kind = dev.device_kind.lower()
    except Exception:
        pass
    if "v7" in kind:
        return 2, 64 << 20           # 2 TCs/chip, 64 MiB VMEM per TC
    if "v4" in kind or "v5p" in kind:
        return 2, 128 << 20          # megacore, 128 MiB
    if "v5" in kind or "v6" in kind:
        return 1, 128 << 20          # v5e / v6e: single TC, 128 MiB
    if "v2" in kind or "v3" in kind:
        return 1, 16 << 20
    return 1, 64 << 20               # unknown: be conservative (fits v7x)


def _pick_tiling(H, V, *, num_splits, tile_budget, max_tn,
                 w_bytes=2, n_buffers=3):
    """Pick (num_splits, tn): tn a multiple of 128 dividing V // num_splits,
    with n_buffers pipelined bf16 W tiles fitting in tile_budget."""
    assert V % 128 == 0, "vocab size must be a multiple of 128"
    if num_splits > 1 and V % (num_splits * 128) != 0:
        num_splits = 1
    v_per = V // num_splits
    best = 128
    t = 128
    while t <= min(v_per, max_tn):
        if v_per % t == 0 and n_buffers * H * t * w_bytes <= tile_budget:
            best = t
        t += 128
    return num_splits, best


# --------------------------------------------------------------------------
# Fused kernel: per contiguous V-tile
#   logits_tile = hidden [Bp, H] @ W_blk[tile]       (bf16 in, f32 acc, MXU)
#   acc        += logits_tile * w_v[tile]            (full-lane VPU adds)
#   final step: o = lane_reduce(acc)                 (one XLU reduce + store)
# --------------------------------------------------------------------------
def _fused_value_kernel(h_ref, wblk_ref, wv_ref, o_ref, acc_ref):
    k = pl.program_id(1)

    @pl.when(k == 0)
    def _init():
        acc_ref[...] = jnp.zeros_like(acc_ref)

    logits_tile = jnp.dot(h_ref[...], wblk_ref[...],
                          preferred_element_type=jnp.float32)     # [Bp, tn] f32
    acc_ref[...] += logits_tile * wv_ref[...].astype(jnp.float32)  # (1,tn) bcast

    @pl.when(k == pl.num_programs(1) - 1)
    def _finalize():
        o_ref[...] = jnp.sum(acc_ref[...], axis=-1, keepdims=True)[None, :, :]


def fused_value_pallas(hidden_bf16, w_lm_blocked, w_v_f32, *,
                       num_splits, tn, vmem_limit):
    Bp, H = hidden_bf16.shape
    nb = w_lm_blocked.shape[0]
    V = nb * tn
    inner = nb // num_splits
    assert num_splits * inner == nb

    # Triple-buffer the dominant W stream when the reduction has enough steps.
    w_spec_kwargs = {}
    if inner >= 3:
        w_spec_kwargs["pipeline_mode"] = pl.Buffered(3)

    cost = pl.CostEstimate(
        flops=2 * Bp * H * V + 2 * Bp * V,
        transcendentals=0,
        bytes_accessed=H * V * 2 + Bp * H * 2 + V * 4 + num_splits * Bp * 4,
    )

    return pl.pallas_call(
        _fused_value_kernel,
        out_shape=jax.ShapeDtypeStruct((num_splits, Bp, 1), jnp.float32),
        grid_spec=pltpu.PrefetchScalarGridSpec(
            num_scalar_prefetch=0,
            grid=(num_splits, inner),
            in_specs=[
                pl.BlockSpec((Bp, H), lambda s, k: (0, 0)),
                pl.BlockSpec((None, H, tn),
                             lambda s, k: (s * inner + k, 0, 0),
                             **w_spec_kwargs),
                pl.BlockSpec((1, tn), lambda s, k: (0, s * inner + k)),
            ],
            out_specs=pl.BlockSpec((1, Bp, 1), lambda s, k: (s, 0, 0)),
            scratch_shapes=[pltpu.VMEM((Bp, tn), jnp.float32)],
        ),
        compiler_params=pltpu.CompilerParams(
            dimension_semantics=("parallel", "arbitrary"),
            vmem_limit_bytes=int(vmem_limit),
        ),
        cost_estimate=cost,
    )(hidden_bf16, w_lm_blocked, w_v_f32)


# --------------------------------------------------------------------------
# Folded fast path (logits never materialized): value = h @ w_eff + b
# --------------------------------------------------------------------------
def _folded_value_kernel(h_ref, weff_ref, o_ref):
    o_ref[...] = jnp.sum(h_ref[...] * weff_ref[...], axis=-1, keepdims=True)


def folded_value_pallas(h_f32, w_eff_row):
    Bp, _ = h_f32.shape
    return pl.pallas_call(
        _folded_value_kernel,
        out_shape=jax.ShapeDtypeStruct((Bp, 1), jnp.float32),
    )(h_f32, w_eff_row)


# --------------------------------------------------------------------------
# Parameter preparation (one-time relayout / fold; NOT per-call work)
# --------------------------------------------------------------------------
def prepare_mistral_vm_params(raw, *, tn_override=None, num_splits_override=None):
    H, V = raw["w_lm"].shape
    num_cores, vmem_bytes = _chip_config()
    if vmem_bytes >= (128 << 20):        # v5e / v6e / v5p / v4
        tile_budget, max_tn, vmem_limit = 80 << 20, 4096, 100 << 20
    elif vmem_bytes >= (64 << 20):       # v7x / unknown
        tile_budget, max_tn, vmem_limit = 36 << 20, 2048, 48 << 20
    else:                                # tiny-VMEM legacy parts
        tile_budget, max_tn, vmem_limit = 8 << 20, 1024, 14 << 20

    num_splits, tn = _pick_tiling(H, V, num_splits=num_cores,
                                  tile_budget=tile_budget, max_tn=max_tn)
    if num_splits_override is not None:
        num_splits = num_splits_override
    if tn_override is not None:
        tn = tn_override
    assert V % (num_splits * tn) == 0, (V, num_splits, tn)

    nb = V // tn
    # Pre-block W_lm into (nb, H, tn) bf16: every grid step DMAs one fully
    # contiguous H*tn*2-byte slab (instead of an H-row strided column copy).
    w_lm_blocked = (raw["w_lm"].astype(jnp.bfloat16)
                    .reshape(H, nb, tn).transpose(1, 0, 2))
    # Algebraic fold: w_eff[h] = sum_v W_lm[h, v] * w_v[0, v]   (f32, exact-ish)
    w_eff_row = jnp.dot(raw["w_lm"], raw["w_v"][0],
                        precision=jax.lax.Precision.HIGHEST)[None, :]   # (1, H)

    return {
        "embed": raw["embed"],
        "w_lm_blocked": w_lm_blocked,
        "w_v": raw["w_v"],
        "b_v": raw["b_v"],
        "w_eff_row": w_eff_row,
        "num_splits": int(num_splits),
        "tn": int(tn),
        "vmem_limit": int(vmem_limit),
    }


# --------------------------------------------------------------------------
# Forward:  synthetic base_model stub  ->  Pallas value head
# --------------------------------------------------------------------------
def _base_model_stub(params, input_ids, attention_mask):
    # TODO(synk): stands in for the full Mistral transformer (out of scope).
    emb = params["embed"][input_ids]                          # [B, S, H]
    mask = attention_mask.astype(jnp.float32)[..., None]      # [B, S, 1]
    pooled = (emb * mask).sum(axis=1) / jnp.maximum(mask.sum(axis=1), 1.0)
    return emb[:, -1, :] + pooled                             # [B, H] f32


def _value_head_fused(params, last_hidden):
    B, H = last_hidden.shape
    # Pad batch to 16 rows: bf16 sublane packing; the W stream is amortized
    # over all padded rows for free (kernel is HBM-bound on W_lm).
    Bp = _round_up(max(B, 16), 16)
    h_p = jnp.zeros((Bp, H), jnp.bfloat16).at[:B].set(
        last_hidden.astype(jnp.bfloat16))
    partials = fused_value_pallas(
        h_p, params["w_lm_blocked"], params["w_v"],
        num_splits=params["num_splits"], tn=params["tn"],
        vmem_limit=params["vmem_limit"])                      # [splits, Bp, 1]
    return partials.sum(axis=0)[:B, 0] + params["b_v"]        # [B]


def _value_head_folded(params, last_hidden):
    B, H = last_hidden.shape
    Bp = _round_up(max(B, 8), 8)
    h_p = jnp.zeros((Bp, H), jnp.float32).at[:B].set(last_hidden)
    out = folded_value_pallas(h_p, params["w_eff_row"])       # [Bp, 1]
    return out[:B, 0] + params["b_v"]                         # [B]


def mistral_vm_forward(params, input_ids, attention_mask, *, fold_lm_head=False):
    last_hidden = _base_model_stub(params, input_ids, attention_mask)
    if fold_lm_head:
        return _value_head_folded(params, last_hidden)
    return _value_head_fused(params, last_hidden)


def init_params(key, vocab_size, hidden):
    k0, k1, k2, k3 = jax.random.split(key, 4)
    return {
        "embed": jax.random.normal(k0, (vocab_size, hidden), jnp.float32) * 0.02,
        "w_lm": jax.random.normal(k1, (hidden, vocab_size), jnp.float32) * 0.02,
        # nn.Linear(vocab_size, 1): weight (1, V), scalar bias
        "w_v": jax.random.normal(k2, (1, vocab_size), jnp.float32) * 0.02,
        "b_v": jax.random.normal(k3, (), jnp.float32) * 0.02,
    }


if __name__ == "__main__":
    B, S, H, V = 2, 8, 32, 1024   # small stand-in for Mistral H=4096, V=32000

    key = jax.random.PRNGKey(0)
    kp, ki = jax.random.split(key)
    raw = init_params(kp, V, H)

    input_ids = jax.random.randint(ki, (B, S), 0, V, dtype=jnp.int32)
    attention_mask = jnp.ones((B, S), dtype=jnp.int32)

    # 1) auto (generation-aware) tiling
    params_auto = prepare_mistral_vm_params(raw)
    v_auto = jax.block_until_ready(
        mistral_vm_forward(params_auto, input_ids, attention_mask))

    # 2) forced small tiles: exercises the 2-way split, multi-step scratch
    #    accumulation and the Buffered(3) W pipeline even at test shapes
    params_small = prepare_mistral_vm_params(raw, tn_override=128,
                                             num_splits_override=2)
    v_small = jax.block_until_ready(
        mistral_vm_forward(params_small, input_ids, attention_mask))

    # 3) algebraic-fold fast path
    v_fold = jax.block_until_ready(
        mistral_vm_forward(params_auto, input_ids, attention_mask,
                           fold_lm_head=True))

    # plain-JAX references
    hi = jax.lax.Precision.HIGHEST
    emb = raw["embed"][input_ids]
    mask = attention_mask.astype(jnp.float32)[..., None]
    pooled = (emb * mask).sum(1) / jnp.maximum(mask.sum(1), 1.0)
    h_f32 = emb[:, -1, :] + pooled
    h_bf = h_f32.astype(jnp.bfloat16).astype(jnp.float32)
    w_lm_bf = raw["w_lm"].astype(jnp.bfloat16).astype(jnp.float32)
    logits_bf = jnp.dot(h_bf, w_lm_bf, precision=hi)
    ref_fused = jnp.dot(logits_bf, raw["w_v"][0], precision=hi) + raw["b_v"]
    ref_fold = jnp.dot(jnp.dot(h_f32, raw["w_lm"], precision=hi),
                       raw["w_v"][0], precision=hi) + raw["b_v"]

    assert v_auto.shape == (B,) and v_small.shape == (B,) and v_fold.shape == (B,)
    assert jnp.allclose(v_auto, ref_fused, atol=1e-4, rtol=2e-3), (v_auto, ref_fused)
    assert jnp.allclose(v_small, ref_fused, atol=1e-4, rtol=2e-3), (v_small, ref_fused)
    assert jnp.allclose(v_fold, ref_fold, atol=1e-4, rtol=2e-3), (v_fold, ref_fold)

    print("KERNEL_OK")
</pallas_src>

<mosaic_0001>
module attributes {stable_mosaic.version = 11 : i64} {
  func.func @_fused_value_kernel(%arg0: i32, %arg1: i32, %arg2: memref<16x32xbf16, #tpu.memory_space<vmem>>, %arg3: memref<1x32x1024xbf16, #tpu.memory_space<vmem>>, %arg4: memref<1x1024xf32, #tpu.memory_space<vmem>>, %arg5: memref<1x16x1xf32, #tpu.memory_space<vmem>>, %arg6: memref<16x1024xf32, #tpu.memory_space<vmem>>) attributes {dimension_semantics = [#tpu.dimension_semantics<parallel>, #tpu.dimension_semantics<arbitrary>], iteration_bounds = array<i64: 1, 1>, scalar_prefetch = 0 : i64, scratch_operands = 1 : i64, tpu.core_type = #tpu.core_type<tc>, window_params = [{pipeline_mode = #tpu.pipeline_mode<synchronous>, transform_indices = @transform_0, window_bounds = array<i64: 16, 32>}, {transform_indices = @transform_1, window_bounds = array<i64: 1, 32, 1024>}, {transform_indices = @transform_2, window_bounds = array<i64: 1, 1024>}, {transform_indices = @transform_3, window_bounds = array<i64: 1, 16, 1>}]} {
    %c0_i32 = arith.constant 0 : i32
    %0 = arith.cmpi eq, %arg1, %c0_i32 : i32
    %1 = arith.extui %0 : i1 to i32
    %c0_i32_0 = arith.constant 0 : i32
    %2 = arith.cmpi ne, %1, %c0_i32_0 : i32
    scf.if %2 {
      %cst_13 = arith.constant 0.000000e+00 : f32
      %16 = vector.broadcast %cst_13 : f32 to vector<16x1024xf32>
      %c0_14 = arith.constant 0 : index
      %c0_15 = arith.constant 0 : index
      %17 = vector.load %arg6[%c0_14, %c0_15] : memref<16x1024xf32, #tpu.memory_space<vmem>>, vector<16x1024xf32>
      tpu.vector_store %arg6[%c0_14, %c0_15], %16 {strides = array<i32>} : memref<16x1024xf32, #tpu.memory_space<vmem>>, vector<16x1024xf32>,
    } else {
    }
    %c0 = arith.constant 0 : index
    %c0_1 = arith.constant 0 : index
    %3 = vector.load %arg2[%c0, %c0_1] : memref<16x32xbf16, #tpu.memory_space<vmem>>, vector<16x32xbf16>
    %c0_2 = arith.constant 0 : index
    %c0_3 = arith.constant 0 : index
    %c0_4 = arith.constant 0 : index
    %4 = vector.load %arg3[%c0_2, %c0_3, %c0_4] : memref<1x32x1024xbf16, #tpu.memory_space<vmem>>, vector<1x32x1024xbf16>
    %5 = vector.shape_cast %4 : vector<1x32x1024xbf16> to vector<32x1024xbf16>
    %cst = arith.constant dense<0.000000e+00> : vector<16x1024xf32>
    %6 = tpu.matmul %3, %5, %cst {dimension_numbers = #tpu.dot_dimension_numbers<[1], [0], [0], [1], [0, 0, 1, 1], [], []>} : vector<16x32xbf16>, vector<32x1024xbf16>, vector<16x1024xf32> -> vector<16x1024xf32>
    %c0_5 = arith.constant 0 : index
    %c0_6 = arith.constant 0 : index
    %7 = vector.load %arg6[%c0_5, %c0_6] : memref<16x1024xf32, #tpu.memory_space<vmem>>, vector<16x1024xf32>
    %c0_7 = arith.constant 0 : index
    %c0_8 = arith.constant 0 : index
    %8 = vector.load %arg4[%c0_7, %c0_8] : memref<1x1024xf32, #tpu.memory_space<vmem>>, vector<1x1024xf32>
    %9 = vector.broadcast %8 : vector<1x1024xf32> to vector<16x1024xf32>
    %10 = arith.mulf %6, %9 : vector<16x1024xf32>
    %11 = arith.addf %7, %10 : vector<16x1024xf32>
    %c0_9 = arith.constant 0 : index
    %c0_10 = arith.constant 0 : index
    %12 = vector.load %arg6[%c0_9, %c0_10] : memref<16x1024xf32, #tpu.memory_space<vmem>>, vector<16x1024xf32>
    tpu.vector_store %arg6[%c0_9, %c0_10], %11 {strides = array<i32>} : memref<16x1024xf32, #tpu.memory_space<vmem>>, vector<16x1024xf32>,
    %c0_i32_11 = arith.constant 0 : i32
    %13 = arith.cmpi eq, %arg1, %c0_i32_11 : i32
    %14 = arith.extui %13 : i1 to i32
    %c0_i32_12 = arith.constant 0 : i32
    %15 = arith.cmpi ne, %14, %c0_i32_12 : i32
    scf.if %15 {
      %c0_13 = arith.constant 0 : index
      %c0_14 = arith.constant 0 : index
      %16 = vector.load %arg6[%c0_13, %c0_14] : memref<16x1024xf32, #tpu.memory_space<vmem>>, vector<16x1024xf32>
      %cst_15 = arith.constant dense<0.000000e+00> : vector<16xf32>
      %17 = vector.multi_reduction <add>, %16, %cst_15 [1] : vector<16x1024xf32> to vector<16xf32>
      %18 = vector.shape_cast %17 : vector<16xf32> to vector<16x1xf32>
      %19 = vector.shape_cast %18 : vector<16x1xf32> to vector<1x16x1xf32>
      %c0_16 = arith.constant 0 : index
      %c0_17 = arith.constant 0 : index
      %c0_18 = arith.constant 0 : index
      %20 = vector.load %arg5[%c0_16, %c0_17, %c0_18] : memref<1x16x1xf32, #tpu.memory_space<vmem>>, vector<1x16x1xf32>
      tpu.vector_store %arg5[%c0_16, %c0_17, %c0_18], %19 {strides = array<i32>} : memref<1x16x1xf32, #tpu.memory_space<vmem>>, vector<1x16x1xf32>,
    } else {
    }
    return
  }
  func.func @transform_0(%arg0: i32, %arg1: i32) -> (i32, i32) {
    %c0_i32 = arith.constant 0 : i32
    %c0_i32_0 = arith.constant 0 : i32
    %c0_i32_1 = arith.constant 0 : i32
    return %c0_i32, %c0_i32_0 : i32, i32
  }
  func.func @transform_1(%arg0: i32, %arg1: i32) -> (i32, i32, i32) {
    %c1_i32 = arith.constant 1 : i32
    %0 = arith.muli %arg0, %c1_i32 : i32
    %1 = arith.addi %0, %arg1 : i32
    %c0_i32 = arith.constant 0 : i32
    %c0_i32_0 = arith.constant 0 : i32
    %c0_i32_1 = arith.constant 0 : i32
    return %1, %c0_i32, %c0_i32_0 : i32, i32, i32
  }
  func.func @transform_2(%arg0: i32, %arg1: i32) -> (i32, i32) {
    %c1_i32 = arith.constant 1 : i32
    %0 = arith.muli %arg0, %c1_i32 : i32
    %1 = arith.addi %0, %arg1 : i32
    %c0_i32 = arith.constant 0 : i32
    %c0_i32_0 = arith.constant 0 : i32
    return %c0_i32, %1 : i32, i32
  }
  func.func @transform_3(%arg0: i32, %arg1: i32) -> (i32, i32, i32) {
    %c0_i32 = arith.constant 0 : i32
    %c0_i32_0 = arith.constant 0 : i32
    %c0_i32_1 = arith.constant 0 : i32
    return %arg0, %c0_i32, %c0_i32_0 : i32, i32, i32
  }
}

</mosaic_0001>

<llo_original>
// kernel: tpu_custom_call.1
$region0: #{tpu_custom_call.1}
  #allocation0 [shape = 'u32[]', space=smem, size = 0x4, offset = 0x4, fixed_abs, tag = 'smem constant byte address 0x4 - core index']
  #allocation1 [shape = 'u32[144,128]{1,0:T(1,128)}', space=vmem, size = 0x12000, scoped, tag = 'internal scratch']
  #allocation2 [shape = 'f32[16,1024]{1,0:T(8,128)}', space=vmem, size = 0x10000, scoped, tag = 'scratch operand']
  %s0 = inlined_call_operand.hbm [shape: bf16[16,32], index: 0, kind: input, shape index: {}]
  %s1 = inlined_call_operand.hbm [shape: bf16[1,32,1024], index: 1, kind: input, shape index: {}]
  %s2 = inlined_call_operand.hbm [shape: f32[1,1024], index: 2, kind: input, shape index: {}]
  %s3 = inlined_call_operand.vmem [shape: f32[1,16,1], index: 3, kind: output, shape index: {}]
  %s4 = sld [smem:[#allocation0]]
  $region42: #{tpu_custom_call.1} parent=0
    _
  %s6 = ssub.s32 1, %s4
  %s7 = scalar_select 0, %s6, %s4
  $region1: #{tpu_custom_call.1} parent=0
    #allocation3 [shape = 'u8[4096]{0}', space=vmem, size = 0x1000, scoped, tag = 'input window, operand 0, single buffered']
    #allocation4 [shape = 's32[1]{0}', space=sflag, size = 0x4, scoped, tag = 'scoped memory for tpu_custom_call.1']
    #allocation5 [shape = 'u8[65536]{0}', space=vmem, size = 0x10000, scoped, tag = 'input window, operand 1, single buffered']
    #allocation6 [shape = 's32[1]{0}', space=sflag, size = 0x4, scoped, tag = 'scoped memory for tpu_custom_call.1']
    #allocation7 [shape = 'u8[4096]{0}', space=vmem, size = 0x1000, scoped, tag = 'input window, operand 2, single buffered']
    %8 = vsyncpa [#allocation4], 0
    %9 = vsyncpa [#allocation6], 0
    // Predicated region
    $region2: #{tpu_custom_call.1} parent=1 // pred_check
      _
    $region3: #{tpu_custom_call.1} parent=1 // pred_check_branch
      %11 = sbr.rel (0) target = $region5
    $region4: #{tpu_custom_call.1} parent=1 // pred_region
      %s13 = ssub.s32 128, 128
      %14 = vsyncadd [#allocation4], %s13
      %s15 = sshll.u32 [#allocation3], 4
      %s16 = int_to_ptr.vmem [resolvable:$true] %s15
      %21 = dma.hbm_to_vmem [thread:$0]  %s0, 128, %s16, [#allocation4], 64, 64, 4
    $region5: #{tpu_custom_call.1} parent=1 // pred_fallthru
      _
    // Predicated region
    $region6: #{tpu_custom_call.1} parent=1 // pred_check
      _
    $region7: #{tpu_custom_call.1} parent=1 // pred_check_branch
      %23 = sbr.rel (0) target = $region9
    $region8: #{tpu_custom_call.1} parent=1 // pred_region
      %s24 = sadd.s32 0, 0
      %s26 = ssub.s32 2048, 2048
      %27 = vsyncadd [#allocation6], %s26
      %s28 = smul.addr %s24, 32
      %s29 = smul.addr %s28, 64
      %s30 = scalar_lea.hbm %s1, %s29
      %s31 = sshll.u32 [#allocation5], 4
      %s32 = int_to_ptr.vmem [resolvable:$true] %s31
      %37 = dma.hbm_to_vmem [thread:$0]  %s30, 2048, %s32, [#allocation6], 512, 512, 32
    $region9: #{tpu_custom_call.1} parent=1 // pred_fallthru
      _
    // Predicated region
    $region10: #{tpu_custom_call.1} parent=1 // pred_check
      _
    $region11: #{tpu_custom_call.1} parent=1 // pred_check_branch
      %39 = sbr.rel (0) target = $region13
    $region12: #{tpu_custom_call.1} parent=1 // pred_region
      %s40 = sadd.s32 0, 0
      %s41 = smul.u32 8, %s40
      %s43 = ssub.s32 128, 128
      %44 = vsyncadd [#allocation6], %s43
      %s45 = smul.addr %s41, 16
      %s46 = scalar_lea.hbm %s2, %s45
      %s48 = sshll.u32 [#allocation7], 4
      %s49 = int_to_ptr.vmem [resolvable:$true] %s48
      %51 = dma.hbm_to_vmem [thread:$0]  %s46, 128, %s49, [#allocation6]
    $region13: #{tpu_custom_call.1} parent=1 // pred_fallthru
      _
    // Predicated region
    $region14: #{tpu_custom_call.1} parent=1 // pred_check
      _
    $region15: #{tpu_custom_call.1} parent=1 // pred_check_branch
      %53 = sbr.rel (0) target = $region17
    $region16: #{tpu_custom_call.1} parent=1 // pred_region
      %54 = dma.done [#allocation4], 128
    $region17: #{tpu_custom_call.1} parent=1 // pred_fallthru
      _
    // Predicated region
    $region18: #{tpu_custom_call.1} parent=1 // pred_check
      _
    $region19: #{tpu_custom_call.1} parent=1 // pred_check_branch
      %56 = sbr.rel (0) target = $region21
    $region20: #{tpu_custom_call.1} parent=1 // pred_region
      %57 = dma.done [#allocation6], 2048
    $region21: #{tpu_custom_call.1} parent=1 // pred_fallthru
      _
    // Predicated region
    $region22: #{tpu_custom_call.1} parent=1 // pred_check
      _
    $region23: #{tpu_custom_call.1} parent=1 // pred_check_branch
      %59 = sbr.rel (0) target = $region25
    $region24: #{tpu_custom_call.1} parent=1 // pred_region
      %60 = dma.done [#allocation6], 128
    $region25: #{tpu_custom_call.1} parent=1 // pred_fallthru
      _
    %s61 = sadd.s32 0, 0
    %s62 = sadd.s32 0, 0
    %s63 = smul.u32 8, %s62
    %p65 = scmp.eq.s32.totalorder 0, 0
    // Predicated region
    $region26: #{tpu_custom_call.1} parent=1 // pred_check
      %p66 = pneg %p65
    $region27: #{tpu_custom_call.1} parent=1 // pred_check_branch
      %68 = sbr.rel (%p66) target = $region29
    $region28: #{tpu_custom_call.1} parent=1 // pred_region
      %69 = vst [vmem:[#allocation2] sm:$0xff] 0.0
      %70 = vst [vmem:[#allocation2 + $0x8] sm:$0xff] 0.0
      %71 = vst [vmem:[#allocation2 + $0x10] sm:$0xff] 0.0
      %72 = vst [vmem:[#allocation2 + $0x18] sm:$0xff] 0.0
      %73 = vst [vmem:[#allocation2 + $0x20] sm:$0xff] 0.0
      %74 = vst [vmem:[#allocation2 + $0x28] sm:$0xff] 0.0
      %75 = vst [vmem:[#allocation2 + $0x30] sm:$0xff] 0.0
      %76 = vst [vmem:[#allocation2 + $0x38] sm:$0xff] 0.0
      %77 = vst [vmem:[#allocation2 + $0x40] sm:$0xff] 0.0
      %78 = vst [vmem:[#allocation2 + $0x48] sm:$0xff] 0.0
      %79 = vst [vmem:[#allocation2 + $0x50] sm:$0xff] 0.0
      %80 = vst [vmem:[#allocation2 + $0x58] sm:$0xff] 0.0
      %81 = vst [vmem:[#allocation2 + $0x60] sm:$0xff] 0.0
      %82 = vst [vmem:[#allocation2 + $0x68] sm:$0xff] 0.0
      %83 = vst [vmem:[#allocation2 + $0x70] sm:$0xff] 0.0
      %84 = vst [vmem:[#allocation2 + $0x78] sm:$0xff] 0.0
    $region29: #{tpu_custom_call.1} parent=1 // pred_fallthru
      _
    %v85 = vld [vmem:[#allocation3] sm:$0xf]
    %v86 = vld [vmem:[#allocation3 + $0x4] sm:$0xf]
    %v87 = vld [vmem:[#allocation5] sm:$0xff]
    %v88 = vld [vmem:[#allocation5 + $0x8] sm:$0xff]
    %v89 = vld [vmem:[#allocation5 + $0x10] sm:$0xff]
    %v90 = vld [vmem:[#allocation5 + $0x18] sm:$0xff]
    %v91 = vld [vmem:[#allocation5 + $0x20] sm:$0xff]
    %v92 = vld [vmem:[#allocation5 + $0x28] sm:$0xff]
    %v93 = vld [vmem:[#allocation5 + $0x30] sm:$0xff]
    %v94 = vld [vmem:[#allocation5 + $0x38] sm:$0xff]
    %v95 = vld [vmem:[#allocation5 + $0x40] sm:$0xff]
    %v96 = vld [vmem:[#allocation5 + $0x48] sm:$0xff]
    %v97 = vld [vmem:[#allocation5 + $0x50] sm:$0xff]
    %v98 = vld [vmem:[#allocation5 + $0x58] sm:$0xff]
    %v99 = vld [vmem:[#allocation5 + $0x60] sm:$0xff]
    %v100 = vld [vmem:[#allocation5 + $0x68] sm:$0xff]
    %v101 = vld [vmem:[#allocation5 + $0x70] sm:$0xff]
    %v102 = vld [vmem:[#allocation5 + $0x78] sm:$0xff]
    %v105 = vunpack.c.l.b16 %v85
    %v106 = vunpack.c.l.b16 %v86
    %v107 = vpack.c.b16 %v106, %v105
    %v124 = vunpack.c.l.b16 %v87
    %v125 = vunpack.c.h.b16 %v87
    %v126 = vunpack.c.l.b16 %v88
    %v127 = vunpack.c.h.b16 %v88
    %v128 = vunpack.c.l.b16 %v89
    %v129 = vunpack.c.h.b16 %v89
    %v130 = vunpack.c.l.b16 %v90
    %v131 = vunpack.c.h.b16 %v90
    %v132 = vunpack.c.l.b16 %v91
    %v133 = vunpack.c.h.b16 %v91
    %v134 = vunpack.c.l.b16 %v92
    %v135 = vunpack.c.h.b16 %v92
    %v136 = vunpack.c.l.b16 %v93
    %v137 = vunpack.c.h.b16 %v93
    %v138 = vunpack.c.l.b16 %v94
    %v139 = vunpack.c.h.b16 %v94
    %v140 = vunpack.c.l.b16 %v95
    %v141 = vunpack.c.h.b16 %v95
    %v142 = vunpack.c.l.b16 %v96
    %v143 = vunpack.c.h.b16 %v96
    %v144 = vunpack.c.l.b16 %v97
    %v145 = vunpack.c.h.b16 %v97
    %v146 = vunpack.c.l.b16 %v98
    %v147 = vunpack.c.h.b16 %v98
    %v148 = vunpack.c.l.b16 %v99
    %v149 = vunpack.c.h.b16 %v99
    %v150 = vunpack.c.l.b16 %v100
    %v151 = vunpack.c.h.b16 %v100
    %v152 = vunpack.c.l.b16 %v101
    %v153 = vunpack.c.h.b16 %v101
    %v154 = vunpack.c.l.b16 %v102
    %v155 = vunpack.c.h.b16 %v102
    %v156 = vpack.c.b16 %v132, %v124
    %v157 = vpack.c.b16 %v133, %v125
    %v158 = vpack.c.b16 %v134, %v126
    %v159 = vpack.c.b16 %v135, %v127
    %v160 = vpack.c.b16 %v136, %v128
    %v161 = vpack.c.b16 %v137, %v129
    %v162 = vpack.c.b16 %v138, %v130
    %v163 = vpack.c.b16 %v139, %v131
    %v164 = vpack.c.b16 %v148, %v140
    %v165 = vpack.c.b16 %v149, %v141
    %v166 = vpack.c.b16 %v150, %v142
    %v167 = vpack.c.b16 %v151, %v143
    %v168 = vpack.c.b16 %v152, %v144
    %v169 = vpack.c.b16 %v153, %v145
    %v170 = vpack.c.b16 %v154, %v146
    %v171 = vpack.c.b16 %v155, %v147
    %vm188 = vcmask 261120
    %v190 = vsel %vm188, %v107, 0
    %192 = vmatprep.subr.bf16.mxu0 %v157
    %193 = vmatpush1.bf16.msra.mxu0 %v156
    %194 = vmatprep.subr.bf16.mxu0 %v165
    %195 = vmatpush1.bf16.msra.mxu0 %v164
    %196 = vmatprep.subr.bf16.mxu0 0
    %197 = vmatpush1.bf16.msra.mxu0 0
    %198 = vmatprep.subr.bf16.mxu0 0
    %199 = vmatpush1.bf16.msra.mxu0 0
    %200 = vmatprep.subr.bf16.mxu0 0
    %201 = vmatpush1.bf16.msra.mxu0 0
    %202 = vmatprep.subr.bf16.mxu0 0
    %203 = vmatpush1.bf16.msra.mxu0 0
    %204 = vmatprep.subr.bf16.mxu0 0
    %205 = vmatpush1.bf16.msra.mxu0 0
    %206 = vmatprep.subr.bf16.mxu0 0
    %207 = vmatpush1.bf16.msra.mxu0 0
    %208 = vmatprep.subr.bf16.mxu0 0
    %209 = vmatpush1.bf16.msra.mxu0 0
    %210 = vmatprep.subr.bf16.mxu0 0
    %211 = vmatpush1.bf16.msra.mxu0 0
    %212 = vmatprep.subr.bf16.mxu0 0
    %213 = vmatpush1.bf16.msra.mxu0 0
    %214 = vmatprep.subr.bf16.mxu0 0
    %215 = vmatpush1.bf16.msra.mxu0 0
    %216 = vmatprep.subr.bf16.mxu0 0
    %217 = vmatpush1.bf16.msra.mxu0 0
    %218 = vmatprep.subr.bf16.mxu0 0
    %219 = vmatpush1.bf16.msra.mxu0 0
    %220 = vmatprep.subr.bf16.mxu0 0
    %221 = vmatpush1.bf16.msra.mxu0 0
    %222 = vmatprep.subr.bf16.mxu0 0
    %223 = vmatpush1.bf16.msra.mxu0 0
    %224 = vmatprep.mubr.bf16.mxu0 0
    %225 = vmatmul.mubr.bf16.gmra.mrb[0].mxu0 %v190
    %v226 = vpop.f32.mrb[0].mxu0
    %v227 = vadd.f32 0.0, %v226
    %v228 = vpop.f32.mrb[0].mxu0
    %v229 = vadd.f32 0.0, %v228
    %v230 = vpop.f32.mrb[0].mxu0
    %v231 = vadd.f32 0.0, %v230
    %v232 = vpop.f32.mrb[0].mxu0
    %v233 = vadd.f32 0.0, %v232
    %234 = vdwg.mxu0
    %235 = vmatprep.subr.bf16.mxu0 %v159
    %236 = vmatpush1.bf16.msra.mxu0 %v158
    %237 = vmatprep.subr.bf16.mxu0 %v167
    %238 = vmatpush1.bf16.msra.mxu0 %v166
    %239 = vmatprep.subr.bf16.mxu0 0
    %240 = vmatpush1.bf16.msra.mxu0 0
    %241 = vmatprep.subr.bf16.mxu0 0
    %242 = vmatpush1.bf16.msra.mxu0 0
    %243 = vmatprep.subr.bf16.mxu0 0
    %244 = vmatpush1.bf16.msra.mxu0 0
    %245 = vmatprep.subr.bf16.mxu0 0
    %246 = vmatpush1.bf16.msra.mxu0 0
    %247 = vmatprep.subr.bf16.mxu0 0
    %248 = vmatpush1.bf16.msra.mxu0 0
    %249 = vmatprep.subr.bf16.mxu0 0
    %250 = vmatpush1.bf16.msra.mxu0 0
    %251 = vmatprep.subr.bf16.mxu0 0
    %252 = vmatpush1.bf16.msra.mxu0 0
    %253 = vmatprep.subr.bf16.mxu0 0
    %254 = vmatpush1.bf16.msra.mxu0 0
    %255 = vmatprep.subr.bf16.mxu0 0
    %256 = vmatpush1.bf16.msra.mxu0 0
    %257 = vmatprep.subr.bf16.mxu0 0
    %258 = vmatpush1.bf16.msra.mxu0 0
    %259 = vmatprep.subr.bf16.mxu0 0
    %260 = vmatpush1.bf16.msra.mxu0 0
    %261 = vmatprep.subr.bf16.mxu0 0
    %262 = vmatpush1.bf16.msra.mxu0 0
    %263 = vmatprep.subr.bf16.mxu0 0
    %264 = vmatpush1.bf16.msra.mxu0 0
    %265 = vmatprep.subr.bf16.mxu0 0
    %266 = vmatpush1.bf16.msra.mxu0 0
    %267 = vmatprep.mubr.bf16.mxu0 0
    %268 = vmatmul.mubr.bf16.gmra.mrb[0].mxu0 %v190
    %v269 = vpop.f32.mrb[0].mxu0
    %v270 = vadd.f32 0.0, %v269
    %v271 = vpop.f32.mrb[0].mxu0
    %v272 = vadd.f32 0.0, %v271
    %v273 = vpop.f32.mrb[0].mxu0
    %v274 = vadd.f32 0.0, %v273
    %v275 = vpop.f32.mrb[0].mxu0
    %v276 = vadd.f32 0.0, %v275
    %277 = vdwg.mxu0
    %278 = vmatprep.subr.bf16.mxu0 %v161
    %279 = vmatpush1.bf16.msra.mxu0 %v160
    %280 = vmatprep.subr.bf16.mxu0 %v169
    %281 = vmatpush1.bf16.msra.mxu0 %v168
    %282 = vmatprep.subr.bf16.mxu0 0
    %283 = vmatpush1.bf16.msra.mxu0 0
    %284 = vmatprep.subr.bf16.mxu0 0
    %285 = vmatpush1.bf16.msra.mxu0 0
    %286 = vmatprep.subr.bf16.mxu0 0
    %287 = vmatpush1.bf16.msra.mxu0 0
    %288 = vmatprep.subr.bf16.mxu0 0
    %289 = vmatpush1.bf16.msra.mxu0 0
    %290 = vmatprep.subr.bf16.mxu0 0
    %291 = vmatpush1.bf16.msra.mxu0 0
    %292 = vmatprep.subr.bf16.mxu0 0
    %293 = vmatpush1.bf16.msra.mxu0 0
    %294 = vmatprep.subr.bf16.mxu0 0
    %295 = vmatpush1.bf16.msra.mxu0 0
    %296 = vmatprep.subr.bf16.mxu0 0
    %297 = vmatpush1.bf16.msra.mxu0 0
    %298 = vmatprep.subr.bf16.mxu0 0
    %299 = vmatpush1.bf16.msra.mxu0 0
    %300 = vmatprep.subr.bf16.mxu0 0
    %301 = vmatpush1.bf16.msra.mxu0 0
    %302 = vmatprep.subr.bf16.mxu0 0
    %303 = vmatpush1.bf16.msra.mxu0 0
    %304 = vmatprep.subr.bf16.mxu0 0
    %305 = vmatpush1.bf16.msra.mxu0 0
    %306 = vmatprep.subr.bf16.mxu0 0
    %307 = vmatpush1.bf16.msra.mxu0 0
    %308 = vmatprep.subr.bf16.mxu0 0
    %309 = vmatpush1.bf16.msra.mxu0 0
    %310 = vmatprep.mubr.bf16.mxu0 0
    %311 = vmatmul.mubr.bf16.gmra.mrb[0].mxu0 %v190
    %v312 = vpop.f32.mrb[0].mxu0
    %v313 = vadd.f32 0.0, %v312
    %v314 = vpop.f32.mrb[0].mxu0
    %v315 = vadd.f32 0.0, %v314
    %v316 = vpop.f32.mrb[0].mxu0
    %v317 = vadd.f32 0.0, %v316
    %v318 = vpop.f32.mrb[0].mxu0
    %v319 = vadd.f32 0.0, %v318
    %320 = vdwg.mxu0
    %321 = vmatprep.subr.bf16.mxu0 %v163
    %322 = vmatpush1.bf16.msra.mxu0 %v162
    %323 = vmatprep.subr.bf16.mxu0 %v171
    %324 = vmatpush1.bf16.msra.mxu0 %v170
    %325 = vmatprep.subr.bf16.mxu0 0
    %326 = vmatpush1.bf16.msra.mxu0 0
    %327 = vmatprep.subr.bf16.mxu0 0
    %328 = vmatpush1.bf16.msra.mxu0 0
    %329 = vmatprep.subr.bf16.mxu0 0
    %330 = vmatpush1.bf16.msra.mxu0 0
    %331 = vmatprep.subr.bf16.mxu0 0
    %332 = vmatpush1.bf16.msra.mxu0 0
    %333 = vmatprep.subr.bf16.mxu0 0
    %334 = vmatpush1.bf16.msra.mxu0 0
    %335 = vmatprep.subr.bf16.mxu0 0
    %336 = vmatpush1.bf16.msra.mxu0 0
    %337 = vmatprep.subr.bf16.mxu0 0
    %338 = vmatpush1.bf16.msra.mxu0 0
    %339 = vmatprep.subr.bf16.mxu0 0
    %340 = vmatpush1.bf16.msra.mxu0 0
    %341 = vmatprep.subr.bf16.mxu0 0
    %342 = vmatpush1.bf16.msra.mxu0 0
    %343 = vmatprep.subr.bf16.mxu0 0
    %344 = vmatpush1.bf16.msra.mxu0 0
    %345 = vmatprep.subr.bf16.mxu0 0
    %346 = vmatpush1.bf16.msra.mxu0 0
    %347 = vmatprep.subr.bf16.mxu0 0
    %348 = vmatpush1.bf16.msra.mxu0 0
    %349 = vmatprep.subr.bf16.mxu0 0
    %350 = vmatpush1.bf16.msra.mxu0 0
    %351 = vmatprep.subr.bf16.mxu0 0
    %352 = vmatpush1.bf16.msra.mxu0 0
    %353 = vmatprep.mubr.bf16.mxu0 0
    %354 = vmatmul.mubr.bf16.gmra.mrb[0].mxu0 %v190
    %v355 = vpop.f32.mrb[0].mxu0
    %v356 = vadd.f32 0.0, %v355
    %v357 = vpop.f32.mrb[0].mxu0
    %v358 = vadd.f32 0.0, %v357
    %v359 = vpop.f32.mrb[0].mxu0
    %v360 = vadd.f32 0.0, %v359
    %v361 = vpop.f32.mrb[0].mxu0
    %v362 = vadd.f32 0.0, %v361
    %363 = vdwg.mxu0
    %v364 = vld [vmem:[#allocation2] sm:$0xff]
    %v365 = vld [vmem:[#allocation2 + $0x8] sm:$0xff]
    %v366 = vld [vmem:[#allocation2 + $0x10] sm:$0xff]
    %v367 = vld [vmem:[#allocation2 + $0x18] sm:$0xff]
    %v368 = vld [vmem:[#allocation2 + $0x20] sm:$0xff]
    %v369 = vld [vmem:[#allocation2 + $0x28] sm:$0xff]
    %v370 = vld [vmem:[#allocation2 + $0x30] sm:$0xff]
    %v371 = vld [vmem:[#allocation2 + $0x38] sm:$0xff]
    %v372 = vld [vmem:[#allocation2 + $0x40] sm:$0xff]
    %v373 = vld [vmem:[#allocation2 + $0x48] sm:$0xff]
    %v374 = vld [vmem:[#allocation2 + $0x50] sm:$0xff]
    %v375 = vld [vmem:[#allocation2 + $0x58] sm:$0xff]
    %v376 = vld [vmem:[#allocation2 + $0x60] sm:$0xff]
    %v377 = vld [vmem:[#allocation2 + $0x68] sm:$0xff]
    %v378 = vld [vmem:[#allocation2 + $0x70] sm:$0xff]
    %v379 = vld [vmem:[#allocation2 + $0x78] sm:$0xff]
    %v380 = vld [vmem:[#allocation7] sm:$0xff]
    %v382 = vlaneseq
    %v383 = vshrl.u32 %v382, 7
    %v384 = vsub.s32 0, %v383
    %v385 = vrot.slane %v380, %v384
    %v386 = vlaneseq
    %v387 = vshrl.u32 %v386, 7
    %v388 = vsub.s32 1, %v387
    %v389 = vrot.slane %v380, %v388
    %v390 = vlaneseq
    %v391 = vshrl.u32 %v390, 7
    %v392 = vsub.s32 2, %v391
    %v393 = vrot.slane %v380, %v392
    %v394 = vlaneseq
    %v395 = vshrl.u32 %v394, 7
    %v396 = vsub.s32 3, %v395
    %v397 = vrot.slane %v380, %v396
    %v398 = vlaneseq
    %v399 = vshrl.u32 %v398, 7
    %v400 = vsub.s32 4, %v399
    %v401 = vrot.slane %v380, %v400
    %v402 = vlaneseq
    %v403 = vshrl.u32 %v402, 7
    %v404 = vsub.s32 5, %v403
    %v405 = vrot.slane %v380, %v404
    %v406 = vlaneseq
    %v407 = vshrl.u32 %v406, 7
    %v408 = vsub.s32 6, %v407
    %v409 = vrot.slane %v380, %v408
    %v410 = vlaneseq
    %v411 = vshrl.u32 %v410, 7
    %v412 = vsub.s32 7, %v411
    %v413 = vrot.slane %v380, %v412
    %v422 = vmul.f32 %v227, %v385
    %v423 = vmul.f32 %v229, %v389
    %v424 = vmul.f32 %v270, %v393
    %v425 = vmul.f32 %v272, %v397
    %v426 = vmul.f32 %v313, %v401
    %v427 = vmul.f32 %v315, %v405
    %v428 = vmul.f32 %v356, %v409
    %v429 = vmul.f32 %v358, %v413
    %v430 = vmul.f32 %v231, %v385
    %v431 = vmul.f32 %v233, %v389
    %v432 = vmul.f32 %v274, %v393
    %v433 = vmul.f32 %v276, %v397
    %v434 = vmul.f32 %v317, %v401
    %v435 = vmul.f32 %v319, %v405
    %v436 = vmul.f32 %v360, %v409
    %v437 = vmul.f32 %v362, %v413
    %v438 = vadd.f32 %v364, %v422
    %v439 = vadd.f32 %v365, %v423
    %v440 = vadd.f32 %v366, %v424
    %v441 = vadd.f32 %v367, %v425
    %v442 = vadd.f32 %v368, %v426
    %v443 = vadd.f32 %v369, %v427
    %v444 = vadd.f32 %v370, %v428
    %v445 = vadd.f32 %v371, %v429
    %v446 = vadd.f32 %v372, %v430
    %v447 = vadd.f32 %v373, %v431
    %v448 = vadd.f32 %v374, %v432
    %v449 = vadd.f32 %v375, %v433
    %v450 = vadd.f32 %v376, %v434
    %v451 = vadd.f32 %v377, %v435
    %v452 = vadd.f32 %v378, %v436
    %v453 = vadd.f32 %v379, %v437
    %454 = vst [vmem:[#allocation2] sm:$0xff] %v438
    %455 = vst [vmem:[#allocation2 + $0x8] sm:$0xff] %v439
    %456 = vst [vmem:[#allocation2 + $0x10] sm:$0xff] %v440
    %457 = vst [vmem:[#allocation2 + $0x18] sm:$0xff] %v441
    %458 = vst [vmem:[#allocation2 + $0x20] sm:$0xff] %v442
    %459 = vst [vmem:[#allocation2 + $0x28] sm:$0xff] %v443
    %460 = vst [vmem:[#allocation2 + $0x30] sm:$0xff] %v444
    %461 = vst [vmem:[#allocation2 + $0x38] sm:$0xff] %v445
    %462 = vst [vmem:[#allocation2 + $0x40] sm:$0xff] %v446
    %463 = vst [vmem:[#allocation2 + $0x48] sm:$0xff] %v447
    %464 = vst [vmem:[#allocation2 + $0x50] sm:$0xff] %v448
    %465 = vst [vmem:[#allocation2 + $0x58] sm:$0xff] %v449
    %466 = vst [vmem:[#allocation2 + $0x60] sm:$0xff] %v450
    %467 = vst [vmem:[#allocation2 + $0x68] sm:$0xff] %v451
    %468 = vst [vmem:[#allocation2 + $0x70] sm:$0xff] %v452
    %469 = vst [vmem:[#allocation2 + $0x78] sm:$0xff] %v453
    // Predicated region
    $region30: #{tpu_custom_call.1} parent=1 // pred_check
      %p470 = pneg %p65
    $region31: #{tpu_custom_call.1} parent=1 // pred_check_branch
      %472 = sbr.rel (%p470) target = $region33
    $region32: #{tpu_custom_call.1} parent=1 // pred_region
      %v473 = vld [vmem:[#allocation2] sm:$0xff]
      %v474 = vld [vmem:[#allocation2 + $0x8] sm:$0xff]
      %v475 = vld [vmem:[#allocation2 + $0x10] sm:$0xff]
      %v476 = vld [vmem:[#allocation2 + $0x18] sm:$0xff]
      %v477 = vld [vmem:[#allocation2 + $0x20] sm:$0xff]
      %v478 = vld [vmem:[#allocation2 + $0x28] sm:$0xff]
      %v479 = vld [vmem:[#allocation2 + $0x30] sm:$0xff]
      %v480 = vld [vmem:[#allocation2 + $0x38] sm:$0xff]
      %v481 = vld [vmem:[#allocation2 + $0x40] sm:$0xff]
      %v482 = vld [vmem:[#allocation2 + $0x48] sm:$0xff]
      %v483 = vld [vmem:[#allocation2 + $0x50] sm:$0xff]
      %v484 = vld [vmem:[#allocation2 + $0x58] sm:$0xff]
      %v485 = vld [vmem:[#allocation2 + $0x60] sm:$0xff]
      %v486 = vld [vmem:[#allocation2 + $0x68] sm:$0xff]
      %v487 = vld [vmem:[#allocation2 + $0x70] sm:$0xff]
      %v488 = vld [vmem:[#allocation2 + $0x78] sm:$0xff]
      %v489 = vadd.f32 %v473, %v474
      %v490 = vadd.f32 %v489, %v475
      %v491 = vadd.f32 %v490, %v476
      %v492 = vadd.f32 %v491, %v477
      %v493 = vadd.f32 %v492, %v478
      %v494 = vadd.f32 %v493, %v479
      %v495 = vadd.f32 %v494, %v480
      %496 = vadd.xlane.f32.xlu0 %v495
      %v497 = vpop.xlane.xlu0 %496
      %v498 = vadd.f32 %v481, %v482
      %v499 = vadd.f32 %v498, %v483
      %v500 = vadd.f32 %v499, %v484
      %v501 = vadd.f32 %v500, %v485
      %v502 = vadd.f32 %v501, %v486
      %v503 = vadd.f32 %v502, %v487
      %v504 = vadd.f32 %v503, %v488
      %505 = vadd.xlane.f32.xlu0 %v504
      %v506 = vpop.xlane.xlu0 %505
      %vm507 = vcmask 7168
      %508 = vst.msk [vmem:[%s3] sm:$0xff] %vm507, %v497
      %509 = vst.msk [vmem:[%s3 + $0x8] sm:$0xff] %vm507, %v506
    $region33: #{tpu_custom_call.1} parent=1 // pred_fallthru
      _
    // Predicated region
    $region34: #{tpu_custom_call.1} parent=1 // pred_check
      _
    $region35: #{tpu_custom_call.1} parent=1 // pred_check_branch
      %511 = sbr.rel (0) target = $region37
    $region36: #{tpu_custom_call.1} parent=1 // pred_region
      _
    $region37: #{tpu_custom_call.1} parent=1 // pred_fallthru
      _
    // Predicated region
    $region38: #{tpu_custom_call.1} parent=1 // pred_check
      _
    $region39: #{tpu_custom_call.1} parent=1 // pred_check_branch
      %513 = sbr.rel (0) target = $region41
    $region40: #{tpu_custom_call.1} parent=1 // pred_region
      _
    $region41: #{tpu_custom_call.1} parent=1 // pred_fallthru
      _
    %514 = vsyncpa [#allocation4], 1
    %515 = vsyncpa [#allocation6], 1

</llo_original>
